<compile_context>
chip_gen: v5e
topology: v5e:2x2
jax: 0.10.0
libtpu: 0.0.40
codegen_flags: <defaults>
</compile_context>

<pallas_src>
import functools

import jax
import jax.numpy as jnp
from jax.experimental import pallas as pl
from jax.experimental.pallas import tpu as pltpu


def _spatial_tile(hw, max_elems=2048):
    """Largest lane-dense (multiple-of-128) tile dividing hw, capped at
    max_elems; falls back to the full extent for small/odd spatial sizes."""
    if hw <= max_elems:
        return hw
    best = None
    t = 128
    while t <= max_elems:
        if hw % t == 0:
            best = t
        t += 128
    return best if best is not None else hw


def _pool_fc_kernel(x_ref, w1_ref, w2_ref, y_ref, acc_ref, *, inv_hw):
    s = pl.program_id(1)

    @pl.when(s == 0)
    def _init():
        acc_ref[...] = jnp.zeros_like(acc_ref)

    # x_ref: (1, C, ts) -> per-channel spatial sum (cross-lane reduce).
    # Channels stay on the sublane axis so no relayout is needed downstream.
    acc_ref[...] += jnp.sum(x_ref[0].astype(jnp.float32), axis=1, keepdims=True)

    @pl.when(s == pl.num_programs(1) - 1)
    def _finalize():
        pooled = acc_ref[...] * inv_hw                                  # (C, 1)
        h = jnp.dot(w1_ref[...], pooled,
                    preferred_element_type=jnp.float32,
                    precision=jax.lax.Precision.HIGHEST)                # (Ch, 1)
        h = jnp.maximum(h, 0.0)                                         # ReLU
        g = jnp.dot(w2_ref[...], h,
                    preferred_element_type=jnp.float32,
                    precision=jax.lax.Precision.HIGHEST)                # (C, 1)
        y_ref[...] = jax.nn.sigmoid(g)[None].astype(y_ref.dtype)        # (1, C, 1)


def _scale_kernel(x_ref, y_ref, o_ref):
    # (1, C, ts) * (1, C, 1): lane-broadcast of the per-channel gate.
    o_ref[...] = (x_ref[...] * y_ref[...]).astype(o_ref.dtype)


def se_layer(x, w1, w2):
    """Squeeze-and-Excitation forward.

    x : (B, C, H, W)  NCHW (PyTorch convention)
    w1: (C // r, C)   first Linear weight (out, in), bias-free
    w2: (C, C // r)   second Linear weight (out, in), bias-free
    returns x * sigmoid(W2 @ relu(W1 @ avgpool(x))) broadcast over H, W.
    """
    B, C, H, W = x.shape
    ch = w1.shape[0]
    assert w1.shape == (ch, C) and w2.shape == (C, ch)
    hw = H * W
    x3 = x.reshape(B, C, hw)
    ts = _spatial_tile(hw)
    assert hw % ts == 0, "spatial tile must divide H*W"
    n_s = hw // ts
    itemsize = jnp.dtype(x.dtype).itemsize

    # ---- kernel 1: global average pool + squeeze/excite MLP -> gate (B, C, 1)
    gate = pl.pallas_call(
        functools.partial(_pool_fc_kernel, inv_hw=1.0 / hw),
        out_shape=jax.ShapeDtypeStruct((B, C, 1), jnp.float32),
        grid=(B, n_s),
        in_specs=[
            pl.BlockSpec((1, C, ts), lambda b, s: (b, 0, s)),
            pl.BlockSpec((ch, C), lambda b, s: (0, 0)),
            pl.BlockSpec((C, ch), lambda b, s: (0, 0)),
        ],
        out_specs=pl.BlockSpec((1, C, 1), lambda b, s: (b, 0, 0)),
        scratch_shapes=[pltpu.VMEM((C, 1), jnp.float32)],
        compiler_params=pltpu.CompilerParams(
            dimension_semantics=("parallel", "arbitrary")),
        cost_estimate=pl.CostEstimate(
            flops=B * (C * hw + 4 * C * ch),
            transcendentals=B * C,
            bytes_accessed=B * C * hw * itemsize + (w1.size + w2.size + B * C) * 4,
        ),
    )(x3, w1.astype(jnp.float32), w2.astype(jnp.float32))

    # ---- kernel 2: elementwise rescale x * gate (lane-dense output tiles)
    out3 = pl.pallas_call(
        _scale_kernel,
        out_shape=jax.ShapeDtypeStruct((B, C, hw), x.dtype),
        grid=(B, n_s),
        in_specs=[
            pl.BlockSpec((1, C, ts), lambda b, s: (b, 0, s)),
            pl.BlockSpec((1, C, 1), lambda b, s: (b, 0, 0)),
        ],
        out_specs=pl.BlockSpec((1, C, ts), lambda b, s: (b, 0, s)),
        compiler_params=pltpu.CompilerParams(
            dimension_semantics=("parallel", "parallel")),
        cost_estimate=pl.CostEstimate(
            flops=B * C * hw,
            transcendentals=0,
            bytes_accessed=2 * B * C * hw * itemsize + B * C * 4,
        ),
    )(x3, gate)
    return out3.reshape(B, C, H, W)


def se_layer_ref(x, w1, w2):
    """Pure-JAX reference matching the PyTorch SELayer forward."""
    y = jnp.mean(x.astype(jnp.float32), axis=(2, 3))                     # (B, C)
    h = jnp.maximum(jnp.dot(y, w1.T, precision=jax.lax.Precision.HIGHEST), 0.0)
    g = jax.nn.sigmoid(jnp.dot(h, w2.T, precision=jax.lax.Precision.HIGHEST))
    return x * g[:, :, None, None].astype(x.dtype)


if __name__ == "__main__":
    B, C, H, W = 2, 64, 16, 16
    reduction = 16
    ch = C // reduction

    key = jax.random.PRNGKey(0)
    kx, k1, k2 = jax.random.split(key, 3)
    x = jax.random.normal(kx, (B, C, H, W), jnp.float32)
    w1 = jax.random.normal(k1, (ch, C), jnp.float32) * (1.0 / C) ** 0.5
    w2 = jax.random.normal(k2, (C, ch), jnp.float32) * (1.0 / ch) ** 0.5

    out = jax.block_until_ready(se_layer(x, w1, w2))
    assert out.shape == (B, C, H, W), out.shape
    assert bool(jnp.all(jnp.isfinite(out)))

    ref = jax.block_until_ready(se_layer_ref(x, w1, w2))
    max_err = float(jnp.max(jnp.abs(out - ref)))
    assert bool(jnp.allclose(out, ref, rtol=2e-3, atol=2e-3)), max_err

    print("KERNEL_OK")
</pallas_src>

<mosaic_0001>
module attributes {stable_mosaic.version = 11 : i64} {
  func.func @_pool_fc_kernel(%arg0: i32, %arg1: i32, %arg2: memref<1x64x256xf32, #tpu.memory_space<vmem>>, %arg3: memref<4x64xf32, #tpu.memory_space<vmem>>, %arg4: memref<64x4xf32, #tpu.memory_space<vmem>>, %arg5: memref<1x64x1xf32, #tpu.memory_space<vmem>>, %arg6: memref<64x1xf32, #tpu.memory_space<vmem>>) attributes {dimension_semantics = [#tpu.dimension_semantics<parallel>, #tpu.dimension_semantics<arbitrary>], iteration_bounds = array<i64: 2, 1>, scalar_prefetch = 0 : i64, scratch_operands = 1 : i64, tpu.core_type = #tpu.core_type<tc>, window_params = [{transform_indices = @transform_0, window_bounds = array<i64: 1, 64, 256>}, {pipeline_mode = #tpu.pipeline_mode<synchronous>, transform_indices = @transform_1, window_bounds = array<i64: 4, 64>}, {pipeline_mode = #tpu.pipeline_mode<synchronous>, transform_indices = @transform_2, window_bounds = array<i64: 64, 4>}, {transform_indices = @transform_3, window_bounds = array<i64: 1, 64, 1>}]} {
    %c0_i32 = arith.constant 0 : i32
    %0 = arith.cmpi eq, %arg1, %c0_i32 : i32
    %1 = arith.extui %0 : i1 to i32
    %c0_i32_0 = arith.constant 0 : i32
    %2 = arith.cmpi ne, %1, %c0_i32_0 : i32
    scf.if %2 {
      %cst_9 = arith.constant 0.000000e+00 : f32
      %13 = vector.broadcast %cst_9 : f32 to vector<64x1xf32>
      %c0_10 = arith.constant 0 : index
      %c0_11 = arith.constant 0 : index
      %14 = vector.load %arg6[%c0_10, %c0_11] : memref<64x1xf32, #tpu.memory_space<vmem>>, vector<64x1xf32>
      tpu.vector_store %arg6[%c0_10, %c0_11], %13 {strides = array<i32>} : memref<64x1xf32, #tpu.memory_space<vmem>>, vector<64x1xf32>,
    } else {
    }
    %c0 = arith.constant 0 : index
    %c0_1 = arith.constant 0 : index
    %3 = vector.load %arg6[%c0, %c0_1] : memref<64x1xf32, #tpu.memory_space<vmem>>, vector<64x1xf32>
    %c0_2 = arith.constant 0 : index
    %c0_3 = arith.constant 0 : index
    %c0_4 = arith.constant 0 : index
    %4 = vector.load %arg2[%c0_2, %c0_3, %c0_4] : memref<1x64x256xf32, #tpu.memory_space<vmem>>, vector<1x64x256xf32>
    %5 = vector.shape_cast %4 : vector<1x64x256xf32> to vector<64x256xf32>
    %cst = arith.constant dense<0.000000e+00> : vector<64xf32>
    %6 = vector.multi_reduction <add>, %5, %cst [1] : vector<64x256xf32> to vector<64xf32>
    %7 = vector.shape_cast %6 : vector<64xf32> to vector<64x1xf32>
    %8 = arith.addf %3, %7 : vector<64x1xf32>
    %c0_5 = arith.constant 0 : index
    %c0_6 = arith.constant 0 : index
    %9 = vector.load %arg6[%c0_5, %c0_6] : memref<64x1xf32, #tpu.memory_space<vmem>>, vector<64x1xf32>
    tpu.vector_store %arg6[%c0_5, %c0_6], %8 {strides = array<i32>} : memref<64x1xf32, #tpu.memory_space<vmem>>, vector<64x1xf32>,
    %c0_i32_7 = arith.constant 0 : i32
    %10 = arith.cmpi eq, %arg1, %c0_i32_7 : i32
    %11 = arith.extui %10 : i1 to i32
    %c0_i32_8 = arith.constant 0 : i32
    %12 = arith.cmpi ne, %11, %c0_i32_8 : i32
    scf.if %12 {
      %c0_9 = arith.constant 0 : index
      %c0_10 = arith.constant 0 : index
      %13 = vector.load %arg6[%c0_9, %c0_10] : memref<64x1xf32, #tpu.memory_space<vmem>>, vector<64x1xf32>
      %cst_11 = arith.constant 3.906250e-03 : f32
      %14 = vector.broadcast %cst_11 : f32 to vector<64x1xf32>
      %15 = arith.mulf %13, %14 : vector<64x1xf32>
      %c0_12 = arith.constant 0 : index
      %c0_13 = arith.constant 0 : index
      %16 = vector.load %arg3[%c0_12, %c0_13] : memref<4x64xf32, #tpu.memory_space<vmem>>, vector<4x64xf32>
      %cst_14 = arith.constant dense<0.000000e+00> : vector<4x1xf32>
      %17 = tpu.matmul %16, %15, %cst_14 {dimension_numbers = #tpu.dot_dimension_numbers<[1], [0], [0], [1], [0, 0, 1, 1], [], []>, precision = #tpu.contract_precision<fp32>} : vector<4x64xf32>, vector<64x1xf32>, vector<4x1xf32> -> vector<4x1xf32>
      %cst_15 = arith.constant 0.000000e+00 : f32
      %18 = vector.broadcast %cst_15 : f32 to vector<4x1xf32>
      %19 = arith.maximumf %17, %18 : vector<4x1xf32>
      %c0_16 = arith.constant 0 : index
      %c0_17 = arith.constant 0 : index
      %20 = vector.load %arg4[%c0_16, %c0_17] : memref<64x4xf32, #tpu.memory_space<vmem>>, vector<64x4xf32>
      %cst_18 = arith.constant dense<0.000000e+00> : vector<64x1xf32>
      %21 = tpu.matmul %20, %19, %cst_18 {dimension_numbers = #tpu.dot_dimension_numbers<[1], [0], [0], [1], [0, 0, 1, 1], [], []>, precision = #tpu.contract_precision<fp32>} : vector<64x4xf32>, vector<4x1xf32>, vector<64x1xf32> -> vector<64x1xf32>
      %22 = arith.negf %21 : vector<64x1xf32>
      %23 = math.exp %22 : vector<64x1xf32>
      %cst_19 = arith.constant 1.000000e+00 : f32
      %24 = vector.broadcast %cst_19 : f32 to vector<64x1xf32>
      %25 = arith.addf %24, %23 : vector<64x1xf32>
      %26 = arith.divf %24, %25 : vector<64x1xf32>
      %27 = vector.shape_cast %26 : vector<64x1xf32> to vector<1x64x1xf32>
      %c0_20 = arith.constant 0 : index
      %c0_21 = arith.constant 0 : index
      %c0_22 = arith.constant 0 : index
      %28 = vector.load %arg5[%c0_20, %c0_21, %c0_22] : memref<1x64x1xf32, #tpu.memory_space<vmem>>, vector<1x64x1xf32>
      tpu.vector_store %arg5[%c0_20, %c0_21, %c0_22], %27 {strides = array<i32>} : memref<1x64x1xf32, #tpu.memory_space<vmem>>, vector<1x64x1xf32>,
    } else {
    }
    return
  }
  func.func @transform_0(%arg0: i32, %arg1: i32) -> (i32, i32, i32) {
    %c0_i32 = arith.constant 0 : i32
    %c0_i32_0 = arith.constant 0 : i32
    return %arg0, %c0_i32, %arg1 : i32, i32, i32
  }
  func.func @transform_1(%arg0: i32, %arg1: i32) -> (i32, i32) {
    %c0_i32 = arith.constant 0 : i32
    %c0_i32_0 = arith.constant 0 : i32
    %c0_i32_1 = arith.constant 0 : i32
    return %c0_i32, %c0_i32_0 : i32, i32
  }
  func.func @transform_2(%arg0: i32, %arg1: i32) -> (i32, i32) {
    %c0_i32 = arith.constant 0 : i32
    %c0_i32_0 = arith.constant 0 : i32
    %c0_i32_1 = arith.constant 0 : i32
    return %c0_i32, %c0_i32_0 : i32, i32
  }
  func.func @transform_3(%arg0: i32, %arg1: i32) -> (i32, i32, i32) {
    %c0_i32 = arith.constant 0 : i32
    %c0_i32_0 = arith.constant 0 : i32
    %c0_i32_1 = arith.constant 0 : i32
    return %arg0, %c0_i32, %c0_i32_0 : i32, i32, i32
  }
}

</mosaic_0001>

<llo_original>
// kernel: tpu_custom_call.1
$region0: #{tpu_custom_call.1}
  #allocation0 [shape = 'u32[]', space=smem, size = 0x4, offset = 0x4, fixed_abs, tag = 'smem constant byte address 0x4 - core index']
  #allocation1 [shape = 'u32[72,128]{1,0:T(1,128)}', space=vmem, size = 0x9000, scoped, tag = 'internal scratch']
  #allocation2 [shape = 'f32[64,1]{1,0:T(8,128)}', space=vmem, size = 0x8000, scoped, tag = 'scratch operand']
  %s0 = inlined_call_operand.hbm [shape: f32[2,64,256], index: 0, kind: input, shape index: {}]
  %s1 = inlined_call_operand.vmem [shape: f32[4,64], index: 1, kind: input, shape index: {}]
  %s2 = inlined_call_operand.vmem [shape: f32[64,4], index: 2, kind: input, shape index: {}]
  %s3 = inlined_call_operand.vmem [shape: f32[2,64,1], index: 3, kind: output, shape index: {}]
  %s4 = sld [smem:[#allocation0]]
  $region57: #{tpu_custom_call.1} parent=0
    _
  %s6 = ssub.s32 1, %s4
  %s7 = scalar_select 0, %s6, %s4
  $region1: #{tpu_custom_call.1} parent=0
    #allocation3 [shape = 'u8[131072]{0}', space=vmem, size = 0x20000, scoped, tag = 'input window, operand 0']
    #allocation4 [shape = 's32[2]{0}', space=sflag, size = 0x8, scoped, tag = 'scoped memory for tpu_custom_call.1']
    %8 = vsyncpa [#allocation4], 0
    %s9 = scalar_lea.sflag [#allocation4], 1
    %10 = vsyncpa %s9, 0
    loop: start=0, step=1, limit=4
    $region2: #{tpu_custom_call.1} parent=1 // loop_pre_header
      _
    $region3: #{tpu_custom_call.1} parent=1 // loop_header
      %s12 = sphi 0, %s16
      %p13 = scmp.ge.s32.totalorder %s12, 4
      %s19 = sphi 0, %s31
      %s20 = sphi 0, %s27
      %s21 = sphi 0, %s19
      %s22 = sphi 0, %s20
      %s23 = sphi 0, %s21
      %s24 = sphi 0, %s22
      %s36 = sphi 0, %s38
      %s39 = sphi 0, %s36
      %s40 = sphi 0, %s39
      %s56 = sphi 0, %s40
      %s60 = sphi 0, %s60
      %s62 = sphi 0, %s60
      %s63 = sphi 0, %s62
      %s77 = sphi 0, %s63
      %s81 = sphi 0, %s81
      %s83 = sphi 0, %s81
      %s84 = sphi 0, %s83
      %s98 = sphi 0, %s84
      %s104 = sphi 0, %s106
      %s107 = sphi 0, %s104
      %s108 = sphi 0, %s107
      %s124 = sphi 0, %s108
    $region4: #{tpu_custom_call.1} parent=1 // loop_header_branch
      %15 = sbr.rel (%p13) target = $region8
    $region5: #{tpu_custom_call.1} parent=1 // loop_body
      %s17 = ssub.s32 %s12, 1
      %s18 = ssub.s32 %s12, 2
      %s25 = sadd.s32 1, %s20
      %p26 = scmp.ge.s32.totalorder %s25, 1
      %s27 = scalar_select %p26, 0, %s25
      %s28 = sadd.s32 1, %s19
      %s29 = scalar_select %p26, %s28, %s19
      %p30 = scmp.ge.s32.totalorder %s29, 2
      %s31 = scalar_select %p30, 0, %s29
      %s32 = ssub.s32 %s19, %s31
      %s33 = ssub.s32 %s20, %s27
      %s34 = sor.u32 %s32, %s33
      %p35 = scmp.eq.s32.totalorder %s34, 0
      %s37 = sadd.s32 %s36, 1
      %s38 = scalar_select %p35, %s36, %s37
      %p41 = pneg %p35
      %p42 = scmp.eq.s32.totalorder %s12, 1
      %p43 = por %p41, %p42
      %p44 = scmp.ne.s32.totalorder %s36, %s39
      %p45 = scmp.eq.s32.totalorder %s12, 0
      %p46 = por %p44, %p45
      %p47 = scmp.ne.s32.totalorder %s36, %s39
      %p48 = scmp.eq.s32.totalorder %s17, 1
      %p49 = por %p47, %p48
      %p50 = scmp.ne.s32.totalorder %s39, %s40
      %p51 = scmp.eq.s32.totalorder %s17, 0
      %p52 = por %p50, %p51
      %p53 = scmp.ne.s32.totalorder %s39, %s40
      %p54 = scmp.eq.s32.totalorder %s18, 1
      %p55 = por %p53, %p54
      %p57 = scmp.ne.s32.totalorder %s40, %s56
      %p58 = scmp.eq.s32.totalorder %s18, 0
      %p59 = por %p57, %p58
      %s61 = sadd.s32 %s60, 1
      %p64 = scmp.eq.s32.totalorder %s12, 1
      %p65 = scmp.ne.s32.totalorder %s60, %s62
      %p66 = scmp.eq.s32.totalorder %s12, 0
      %p67 = por %p65, %p66
      %p68 = scmp.ne.s32.totalorder %s60, %s62
      %p69 = scmp.eq.s32.totalorder %s17, 1
      %p70 = por %p68, %p69
      %p71 = scmp.ne.s32.totalorder %s62, %s63
      %p72 = scmp.eq.s32.totalorder %s17, 0
      %p73 = por %p71, %p72
      %p74 = scmp.ne.s32.totalorder %s62, %s63
      %p75 = scmp.eq.s32.totalorder %s18, 1
      %p76 = por %p74, %p75
      %p78 = scmp.ne.s32.totalorder %s63, %s77
      %p79 = scmp.eq.s32.totalorder %s18, 0
      %p80 = por %p78, %p79
      %s82 = sadd.s32 %s81, 1
      %p85 = scmp.eq.s32.totalorder %s12, 1
      %p86 = scmp.ne.s32.totalorder %s81, %s83
      %p87 = scmp.eq.s32.totalorder %s12, 0
      %p88 = por %p86, %p87
      %p89 = scmp.ne.s32.totalorder %s81, %s83
      %p90 = scmp.eq.s32.totalorder %s17, 1
      %p91 = por %p89, %p90
      %p92 = scmp.ne.s32.totalorder %s83, %s84
      %p93 = scmp.eq.s32.totalorder %s17, 0
      %p94 = por %p92, %p93
      %p95 = scmp.ne.s32.totalorder %s83, %s84
      %p96 = scmp.eq.s32.totalorder %s18, 1
      %p97 = por %p95, %p96
      %p99 = scmp.ne.s32.totalorder %s84, %s98
      %p100 = scmp.eq.s32.totalorder %s18, 0
      %p101 = por %p99, %p100
      %s102 = ssub.s32 %s19, %s31
      %p103 = scmp.eq.s32.totalorder %s102, 0
      %s105 = sadd.s32 %s104, 1
      %s106 = scalar_select %p103, %s104, %s105
      %p109 = pneg %p103
      %p110 = scmp.eq.s32.totalorder %s12, 1
      %p111 = por %p109, %p110
      %p112 = scmp.ne.s32.totalorder %s104, %s107
      %p113 = scmp.eq.s32.totalorder %s12, 0
      %p114 = por %p112, %p113
      %p115 = scmp.ne.s32.totalorder %s104, %s107
      %p116 = scmp.eq.s32.totalorder %s17, 1
      %p117 = por %p115, %p116
      %p118 = scmp.ne.s32.totalorder %s107, %s108
      %p119 = scmp.eq.s32.totalorder %s17, 0
      %p120 = por %p118, %p119
      %p121 = scmp.ne.s32.totalorder %s107, %s108
      %p122 = scmp.eq.s32.totalorder %s18, 1
      %p123 = por %p121, %p122
      %p125 = scmp.ne.s32.totalorder %s108, %s124
      %p126 = scmp.eq.s32.totalorder %s18, 0
      %p127 = por %p125, %p126
      %p128 = scmp.le.s32.totalorder 1, %s12
      %p129 = scmp.lt.s32.totalorder %s12, 3
      %p130 = pnand %p128, %p129
      %p131 = pneg %p130
      // Predicated region
      $region9: #{tpu_custom_call.1} parent=5 // pred_check
        _
      $region10: #{tpu_custom_call.1} parent=5 // pred_check_branch
        %133 = sbr.rel (%p130) target = $region12
      $region11: #{tpu_custom_call.1} parent=5 // pred_region
        %s134 = ssub.s32 %s12, 1
        // Predicated region
        $region13: #{tpu_custom_call.1} parent=11 // pred_check
          %p135 = pneg %p73
        $region14: #{tpu_custom_call.1} parent=11 // pred_check_branch
          %137 = sbr.rel (%p135) target = $region16
        $region15: #{tpu_custom_call.1} parent=11 // pred_region
          _
        $region16: #{tpu_custom_call.1} parent=11 // pred_fallthru
          _
        // Predicated region
        $region17: #{tpu_custom_call.1} parent=11 // pred_check
          %p138 = pneg %p94
        $region18: #{tpu_custom_call.1} parent=11 // pred_check_branch
          %140 = sbr.rel (%p138) target = $region20
        $region19: #{tpu_custom_call.1} parent=11 // pred_region
          _
        $region20: #{tpu_custom_call.1} parent=11 // pred_fallthru
          _
      $region12: #{tpu_custom_call.1} parent=5 // pred_fallthru
        _
      %p141 = scmp.lt.s32.totalorder %s12, 2
      // Predicated region
      $region21: #{tpu_custom_call.1} parent=5 // pred_check
        %p142 = pneg %p141
      $region22: #{tpu_custom_call.1} parent=5 // pred_check_branch
        %144 = sbr.rel (%p142) target = $region24
      $region23: #{tpu_custom_call.1} parent=5 // pred_region
        // Predicated region
        $region25: #{tpu_custom_call.1} parent=23 // pred_check
          %p145 = pneg %p46
        $region26: #{tpu_custom_call.1} parent=23 // pred_check_branch
          %147 = sbr.rel (%p145) target = $region28
        $region27: #{tpu_custom_call.1} parent=23 // pred_region
          %s148 = sand.u32 %s36, 1
          %s149 = scalar_lea.sflag [#allocation4], %s148
          %s150 = sand.u32 %s36, 1
          %s151 = smul.addr %s150, 128
          %s152 = scalar_lea.vmem [#allocation3], %s151
          %s153 = smul.u32 2, %s20
          %155 = vsyncadd %s149, 0
          %s156 = smul.addr %s19, 16
          %s157 = sadd.s32 %s153, %s156
          %s158 = smul.addr %s157, 8
          %s159 = scalar_lea.hbm %s0, %s158
          %s160 = sshll.u32 %s159, 4
          %s161 = int_to_ptr.hbm [resolvable:$true] %s160
          %s162 = sshll.u32 %s152, 4
          %s163 = int_to_ptr.vmem [resolvable:$true] %s162
          %168 = dma.hbm_to_vmem [thread:$0]  %s161, 2048, %s163, %s149, 256, 256, 16
        $region28: #{tpu_custom_call.1} parent=23 // pred_fallthru
          _
      $region24: #{tpu_custom_call.1} parent=5 // pred_fallthru
        _
      %p169 = scmp.le.s32.totalorder 1, %s12
      %p170 = scmp.lt.s32.totalorder %s12, 3
      %p171 = pnand %p169, %p170
      %p172 = pneg %p171
      // Predicated region
      $region29: #{tpu_custom_call.1} parent=5 // pred_check
        _
      $region30: #{tpu_custom_call.1} parent=5 // pred_check_branch
        %174 = sbr.rel (%p171) target = $region32
      $region31: #{tpu_custom_call.1} parent=5 // pred_region
        %s175 = ssub.s32 %s12, 1
        %s176 = sand.u32 %s39, 1
        %s177 = scalar_lea.sflag [#allocation4], %s176
        %s178 = sand.u32 %s39, 1
        %s179 = smul.addr %s178, 128
        %s180 = scalar_lea.vmem [#allocation3], %s179
        // Predicated region
        $region33: #{tpu_custom_call.1} parent=31 // pred_check
          %p181 = pneg %p52
        $region34: #{tpu_custom_call.1} parent=31 // pred_check_branch
          %183 = sbr.rel (%p181) target = $region36
        $region35: #{tpu_custom_call.1} parent=31 // pred_region
          %185 = dma.done %s177, 2048
        $region36: #{tpu_custom_call.1} parent=31 // pred_fallthru
          _
        %s186 = sand.u32 %s39, 1
        %s187 = scalar_lea.sflag [#allocation4], %s186
        %s188 = sand.u32 %s39, 1
        %s189 = smul.addr %s188, 128
        %s190 = scalar_lea.vmem [#allocation3], %s189
        %p191 = pneg %p52
        %p192 = pneg %p49
        %p193 = pneg %p73
        %p194 = pneg %p70
        %p195 = pneg %p94
        %p196 = pneg %p91
        %p197 = pneg %p120
        %p198 = pneg %p117
        %p199 = scmp.lt.s32.totalorder %s21, 1
        %s200 = scalar_select %p199, %s21, 1
        %s201 = smul.addr %s200, 8
        %s202 = smul.addr %s201, 8
        %s203 = scalar_lea.vmem %s3, %s202
        %s204 = smul.u32 2, %s22
        %p205 = scmp.lt.s32.totalorder %s21, 1
        %s206 = scalar_select %p205, %s21, 1
        %s207 = smul.addr %s206, 8
        %s208 = smul.addr %s207, 8
        %s209 = scalar_lea.vmem %s3, %s208
        %p210 = scmp.eq.s32.totalorder %s22, 0
        // Predicated region
        $region37: #{tpu_custom_call.1} parent=31 // pred_check
          %p211 = pneg %p210
        $region38: #{tpu_custom_call.1} parent=31 // pred_check_branch
          %213 = sbr.rel (%p211) target = $region40
        $region39: #{tpu_custom_call.1} parent=31 // pred_region
          %vm214 = vcmask 7168
          %215 = vst.msk [vmem:[#allocation2] sm:$0xff] %vm214, 0.0
          %216 = vst.msk [vmem:[#allocation2 + $0x8] sm:$0xff] %vm214, 0.0
          %217 = vst.msk [vmem:[#allocation2 + $0x10] sm:$0xff] %vm214, 0.0
          %218 = vst.msk [vmem:[#allocation2 + $0x18] sm:$0xff] %vm214, 0.0
          %219 = vst.msk [vmem:[#allocation2 + $0x20] sm:$0xff] %vm214, 0.0
          %220 = vst.msk [vmem:[#allocation2 + $0x28] sm:$0xff] %vm214, 0.0
          %221 = vst.msk [vmem:[#allocation2 + $0x30] sm:$0xff] %vm214, 0.0
          %222 = vst.msk [vmem:[#allocation2 + $0x38] sm:$0xff] %vm214, 0.0
        $region40: #{tpu_custom_call.1} parent=31 // pred_fallthru
          _
        %v223 = vld [vmem:[#allocation2] sm:$0xff]
        %v224 = vld [vmem:[#allocation2 + $0x8] sm:$0xff]
        %v225 = vld [vmem:[#allocation2 + $0x10] sm:$0xff]
        %v226 = vld [vmem:[#allocation2 + $0x18] sm:$0xff]
        %v227 = vld [vmem:[#allocation2 + $0x20] sm:$0xff]
        %v228 = vld [vmem:[#allocation2 + $0x28] sm:$0xff]
        %v229 = vld [vmem:[#allocation2 + $0x30] sm:$0xff]
        %v230 = vld [vmem:[#allocation2 + $0x38] sm:$0xff]
        %v231 = vld [vmem:[%s180] sm:$0xff]
        %v232 = vld [vmem:[%s180 + $0x8] sm:$0xff]
        %v233 = vld [vmem:[%s180 + $0x10] sm:$0xff]
        %v234 = vld [vmem:[%s180 + $0x18] sm:$0xff]
        %v235 = vld [vmem:[%s180 + $0x20] sm:$0xff]
        %v236 = vld [vmem:[%s180 + $0x28] sm:$0xff]
        %v237 = vld [vmem:[%s180 + $0x30] sm:$0xff]
        %v238 = vld [vmem:[%s180 + $0x38] sm:$0xff]
        %v239 = vld [vmem:[%s180 + $0x40] sm:$0xff]
        %v240 = vld [vmem:[%s180 + $0x48] sm:$0xff]
        %v241 = vld [vmem:[%s180 + $0x50] sm:$0xff]
        %v242 = vld [vmem:[%s180 + $0x58] sm:$0xff]
        %v243 = vld [vmem:[%s180 + $0x60] sm:$0xff]
        %v244 = vld [vmem:[%s180 + $0x68] sm:$0xff]
        %v245 = vld [vmem:[%s180 + $0x70] sm:$0xff]
        %v246 = vld [vmem:[%s180 + $0x78] sm:$0xff]
        %v247 = vadd.f32 %v231, %v232
        %248 = vadd.xlane.f32.xlu0 %v247
        %v249 = vpop.xlane.xlu0 %248
        %v250 = vadd.f32 %v233, %v234
        %251 = vadd.xlane.f32.xlu0 %v250
        %v252 = vpop.xlane.xlu0 %251
        %v253 = vadd.f32 %v235, %v236
        %254 = vadd.xlane.f32.xlu0 %v253
        %v255 = vpop.xlane.xlu0 %254
        %v256 = vadd.f32 %v237, %v238
        %257 = vadd.xlane.f32.xlu0 %v256
        %v258 = vpop.xlane.xlu0 %257
        %v259 = vadd.f32 %v239, %v240
        %260 = vadd.xlane.f32.xlu0 %v259
        %v261 = vpop.xlane.xlu0 %260
        %v262 = vadd.f32 %v241, %v242
        %263 = vadd.xlane.f32.xlu0 %v262
        %v264 = vpop.xlane.xlu0 %263
        %v265 = vadd.f32 %v243, %v244
        %266 = vadd.xlane.f32.xlu0 %v265
        %v267 = vpop.xlane.xlu0 %266
        %v268 = vadd.f32 %v245, %v246
        %269 = vadd.xlane.f32.xlu0 %v268
        %v270 = vpop.xlane.xlu0 %269
        %v271 = vadd.f32 %v223, %v249
        %v272 = vadd.f32 %v224, %v252
        %v273 = vadd.f32 %v225, %v255
        %v274 = vadd.f32 %v226, %v258
        %v275 = vadd.f32 %v227, %v261
        %v276 = vadd.f32 %v228, %v264
        %v277 = vadd.f32 %v229, %v267
        %v278 = vadd.f32 %v230, %v270
        %vm279 = vcmask 7168
        %280 = vst.msk [vmem:[#allocation2] sm:$0xff] %vm279, %v271
        %281 = vst.msk [vmem:[#allocation2 + $0x8] sm:$0xff] %vm279, %v272
        %282 = vst.msk [vmem:[#allocation2 + $0x10] sm:$0xff] %vm279, %v273
        %283 = vst.msk [vmem:[#allocation2 + $0x18] sm:$0xff] %vm279, %v274
        %284 = vst.msk [vmem:[#allocation2 + $0x20] sm:$0xff] %vm279, %v275
        %285 = vst.msk [vmem:[#allocation2 + $0x28] sm:$0xff] %vm279, %v276
        %286 = vst.msk [vmem:[#allocation2 + $0x30] sm:$0xff] %vm279, %v277
        %287 = vst.msk [vmem:[#allocation2 + $0x38] sm:$0xff] %vm279, %v278
        // Predicated region
        $region41: #{tpu_custom_call.1} parent=31 // pred_check
          %p288 = pneg %p210
        $region42: #{tpu_custom_call.1} parent=31 // pred_check_branch
          %290 = sbr.rel (%p288) target = $region44
        $region43: #{tpu_custom_call.1} parent=31 // pred_region
          %v291 = vld [vmem:[#allocation2] sm:$0xff]
          %v292 = vld [vmem:[#allocation2 + $0x8] sm:$0xff]
          %v293 = vld [vmem:[#allocation2 + $0x10] sm:$0xff]
          %v294 = vld [vmem:[#allocation2 + $0x18] sm:$0xff]
          %v295 = vld [vmem:[#allocation2 + $0x20] sm:$0xff]
          %v296 = vld [vmem:[#allocation2 + $0x28] sm:$0xff]
          %v297 = vld [vmem:[#allocation2 + $0x30] sm:$0xff]
          %v298 = vld [vmem:[#allocation2 + $0x38] sm:$0xff]
          %v299 = vmul.f32 %v291, 0.00390625
          %v300 = vmul.f32 %v292, 0.00390625
          %v301 = vmul.f32 %v293, 0.00390625
          %v302 = vmul.f32 %v294, 0.00390625
          %v303 = vmul.f32 %v295, 0.00390625
          %v304 = vmul.f32 %v296, 0.00390625
          %v305 = vmul.f32 %v297, 0.00390625
          %v306 = vmul.f32 %v298, 0.00390625
          %v307 = vld [vmem:[%s1] sm:$0xf]
          %vm308 = vcmask 523264
          %v310 = vsel %vm308, %v307, 0
          %312 = vmatpush.msra.mxu0 0.0
          %313 = vmatpush.msra.mxu0 0.0
          %314 = vmatpush.msra.mxu0 0.0
          %315 = vmatpush.msra.mxu0 0.0
          %316 = vmatpush.msra.mxu0 0.0
          %317 = vmatpush.msra.mxu0 0.0
          %318 = vmatpush.msra.mxu0 0.0
          %319 = vmatpush.msra.mxu0 0.0
          %v320 = vand.u32 %v306, 4294901760
          %321 = vmatpush.msra.mxu0 %v320
          %v322 = vand.u32 %v305, 4294901760
          %323 = vmatpush.msra.mxu0 %v322
          %v324 = vand.u32 %v304, 4294901760
          %325 = vmatpush.msra.mxu0 %v324
          %v326 = vand.u32 %v303, 4294901760
          %327 = vmatpush.msra.mxu0 %v326
          %v328 = vand.u32 %v302, 4294901760
          %329 = vmatpush.msra.mxu0 %v328
          %v330 = vand.u32 %v301, 4294901760
          %331 = vmatpush.msra.mxu0 %v330
          %v332 = vand.u32 %v300, 4294901760
          %333 = vmatpush.msra.mxu0 %v332
          %v334 = vand.u32 %v299, 4294901760
          %335 = vmatpush.msra.mxu0 %v334
          %v336 = vand.u32 %v310, 4294901760
          %v337 = vsub.f32 %v310, %v336
          %v338 = vand.u32 %v337, 4294901760
          %v339 = vsub.f32 %v337, %v338
          %v340 = vand.u32 %v339, 4294901760
          %341 = vmatmul.f32.gmra.mxu0 %v340
          %v342 = vpop.f32.mrf.mxu0
          %v343 = vadd.f32 0.0, %v342
          %344 = vdwg.mxu0
          %345 = vmatpush.msra.mxu0 0.0
          %346 = vmatpush.msra.mxu0 0.0
          %347 = vmatpush.msra.mxu0 0.0
          %348 = vmatpush.msra.mxu0 0.0
          %349 = vmatpush.msra.mxu0 0.0
          %350 = vmatpush.msra.mxu0 0.0
          %351 = vmatpush.msra.mxu0 0.0
          %352 = vmatpush.msra.mxu0 0.0
          %v353 = vand.u32 %v306, 4294901760
          %v354 = vsub.f32 %v306, %v353
          %v355 = vand.u32 %v354, 4294901760
          %v356 = vsub.f32 %v354, %v355
          %v357 = vand.u32 %v356, 4294901760
          %358 = vmatpush.msra.mxu0 %v357
          %v359 = vand.u32 %v305, 4294901760
          %v360 = vsub.f32 %v305, %v359
          %v361 = vand.u32 %v360, 4294901760
          %v362 = vsub.f32 %v360, %v361
          %v363 = vand.u32 %v362, 4294901760
          %364 = vmatpush.msra.mxu0 %v363
          %v365 = vand.u32 %v304, 4294901760
          %v366 = vsub.f32 %v304, %v365
          %v367 = vand.u32 %v366, 4294901760
          %v368 = vsub.f32 %v366, %v367
          %v369 = vand.u32 %v368, 4294901760
          %370 = vmatpush.msra.mxu0 %v369
          %v371 = vand.u32 %v303, 4294901760
          %v372 = vsub.f32 %v303, %v371
          %v373 = vand.u32 %v372, 4294901760
          %v374 = vsub.f32 %v372, %v373
          %v375 = vand.u32 %v374, 4294901760
          %376 = vmatpush.msra.mxu0 %v375
          %v377 = vand.u32 %v302, 4294901760
          %v378 = vsub.f32 %v302, %v377
          %v379 = vand.u32 %v378, 4294901760
          %v380 = vsub.f32 %v378, %v379
          %v381 = vand.u32 %v380, 4294901760
          %382 = vmatpush.msra.mxu0 %v381
          %v383 = vand.u32 %v301, 4294901760
          %v384 = vsub.f32 %v301, %v383
          %v385 = vand.u32 %v384, 4294901760
          %v386 = vsub.f32 %v384, %v385
          %v387 = vand.u32 %v386, 4294901760
          %388 = vmatpush.msra.mxu0 %v387
          %v389 = vand.u32 %v300, 4294901760
          %v390 = vsub.f32 %v300, %v389
          %v391 = vand.u32 %v390, 4294901760
          %v392 = vsub.f32 %v390, %v391
          %v393 = vand.u32 %v392, 4294901760
          %394 = vmatpush.msra.mxu0 %v393
          %v395 = vand.u32 %v299, 4294901760
          %v396 = vsub.f32 %v299, %v395
          %v397 = vand.u32 %v396, 4294901760
          %v398 = vsub.f32 %v396, %v397
          %v399 = vand.u32 %v398, 4294901760
          %400 = vmatpush.msra.mxu0 %v399
          %v401 = vand.u32 %v310, 4294901760
          %402 = vmatmul.f32.gmra.mxu0 %v401
          %v403 = vpop.f32.mrf.mxu0
          %v404 = vadd.f32 %v343, %v403
          %405 = vdwg.mxu0
          %406 = vmatpush.msra.mxu0 0.0
          %407 = vmatpush.msra.mxu0 0.0
          %408 = vmatpush.msra.mxu0 0.0
          %409 = vmatpush.msra.mxu0 0.0
          %410 = vmatpush.msra.mxu0 0.0
          %411 = vmatpush.msra.mxu0 0.0
          %412 = vmatpush.msra.mxu0 0.0
          %413 = vmatpush.msra.mxu0 0.0
          %v414 = vand.u32 %v306, 4294901760
          %v415 = vsub.f32 %v306, %v414
          %416 = vmatpush.msra.mxu0 %v415
          %v417 = vand.u32 %v305, 4294901760
          %v418 = vsub.f32 %v305, %v417
          %419 = vmatpush.msra.mxu0 %v418
          %v420 = vand.u32 %v304, 4294901760
          %v421 = vsub.f32 %v304, %v420
          %422 = vmatpush.msra.mxu0 %v421
          %v423 = vand.u32 %v303, 4294901760
          %v424 = vsub.f32 %v303, %v423
          %425 = vmatpush.msra.mxu0 %v424
          %v426 = vand.u32 %v302, 4294901760
          %v427 = vsub.f32 %v302, %v426
          %428 = vmatpush.msra.mxu0 %v427
          %v429 = vand.u32 %v301, 4294901760
          %v430 = vsub.f32 %v301, %v429
          %431 = vmatpush.msra.mxu0 %v430
          %v432 = vand.u32 %v300, 4294901760
          %v433 = vsub.f32 %v300, %v432
          %434 = vmatpush.msra.mxu0 %v433
          %v435 = vand.u32 %v299, 4294901760
          %v436 = vsub.f32 %v299, %v435
          %437 = vmatpush.msra.mxu0 %v436
          %v438 = vand.u32 %v310, 4294901760
          %v439 = vsub.f32 %v310, %v438
          %440 = vmatmul.f32.gmra.mxu0 %v439
          %v441 = vpop.f32.mrf.mxu0
          %v442 = vadd.f32 %v404, %v441
          %443 = vdwg.mxu0
          %444 = vmatpush.msra.mxu0 0.0
          %445 = vmatpush.msra.mxu0 0.0
          %446 = vmatpush.msra.mxu0 0.0
          %447 = vmatpush.msra.mxu0 0.0
          %448 = vmatpush.msra.mxu0 0.0
          %449 = vmatpush.msra.mxu0 0.0
          %450 = vmatpush.msra.mxu0 0.0
          %451 = vmatpush.msra.mxu0 0.0
          %v452 = vand.u32 %v306, 4294901760
          %453 = vmatpush.msra.mxu0 %v452
          %v454 = vand.u32 %v305, 4294901760
          %455 = vmatpush.msra.mxu0 %v454
          %v456 = vand.u32 %v304, 4294901760
          %457 = vmatpush.msra.mxu0 %v456
          %v458 = vand.u32 %v303, 4294901760
          %459 = vmatpush.msra.mxu0 %v458
          %v460 = vand.u32 %v302, 4294901760
          %461 = vmatpush.msra.mxu0 %v460
          %v462 = vand.u32 %v301, 4294901760
          %463 = vmatpush.msra.mxu0 %v462
          %v464 = vand.u32 %v300, 4294901760
          %465 = vmatpush.msra.mxu0 %v464
          %v466 = vand.u32 %v299, 4294901760
          %467 = vmatpush.msra.mxu0 %v466
          %v468 = vand.u32 %v310, 4294901760
          %v469 = vsub.f32 %v310, %v468
          %v470 = vand.u32 %v469, 4294901760
          %471 = vmatmul.f32.gmra.mxu0 %v470
          %v472 = vpop.f32.mrf.mxu0
          %v473 = vadd.f32 %v442, %v472
          %474 = vdwg.mxu0
          %475 = vmatpush.msra.mxu0 0.0
          %476 = vmatpush.msra.mxu0 0.0
          %477 = vmatpush.msra.mxu0 0.0
          %478 = vmatpush.msra.mxu0 0.0
          %479 = vmatpush.msra.mxu0 0.0
          %480 = vmatpush.msra.mxu0 0.0
          %481 = vmatpush.msra.mxu0 0.0
          %482 = vmatpush.msra.mxu0 0.0
          %v483 = vand.u32 %v306, 4294901760
          %v484 = vsub.f32 %v306, %v483
          %v485 = vand.u32 %v484, 4294901760
          %486 = vmatpush.msra.mxu0 %v485
          %v487 = vand.u32 %v305, 4294901760
          %v488 = vsub.f32 %v305, %v487
          %v489 = vand.u32 %v488, 4294901760
          %490 = vmatpush.msra.mxu0 %v489
          %v491 = vand.u32 %v304, 4294901760
          %v492 = vsub.f32 %v304, %v491
          %v493 = vand.u32 %v492, 4294901760
          %494 = vmatpush.msra.mxu0 %v493
          %v495 = vand.u32 %v303, 4294901760
          %v496 = vsub.f32 %v303, %v495
          %v497 = vand.u32 %v496, 4294901760
          %498 = vmatpush.msra.mxu0 %v497
          %v499 = vand.u32 %v302, 4294901760
          %v500 = vsub.f32 %v302, %v499
          %v501 = vand.u32 %v500, 4294901760
          %502 = vmatpush.msra.mxu0 %v501
          %v503 = vand.u32 %v301, 4294901760
          %v504 = vsub.f32 %v301, %v503
          %v505 = vand.u32 %v504, 4294901760
          %506 = vmatpush.msra.mxu0 %v505
          %v507 = vand.u32 %v300, 4294901760
          %v508 = vsub.f32 %v300, %v507
          %v509 = vand.u32 %v508, 4294901760
          %510 = vmatpush.msra.mxu0 %v509
          %v511 = vand.u32 %v299, 4294901760
          %v512 = vsub.f32 %v299, %v511
          %v513 = vand.u32 %v512, 4294901760
          %514 = vmatpush.msra.mxu0 %v513
          %v515 = vand.u32 %v310, 4294901760
          %516 = vmatmul.f32.gmra.mxu0 %v515
          %v517 = vpop.f32.mrf.mxu0
          %v518 = vadd.f32 %v473, %v517
          %519 = vdwg.mxu0
          %520 = vmatpush.msra.mxu0 0.0
          %521 = vmatpush.msra.mxu0 0.0
          %522 = vmatpush.msra.mxu0 0.0
          %523 = vmatpush.msra.mxu0 0.0
          %524 = vmatpush.msra.mxu0 0.0
          %525 = vmatpush.msra.mxu0 0.0
          %526 = vmatpush.msra.mxu0 0.0
          %527 = vmatpush.msra.mxu0 0.0
          %v528 = vand.u32 %v306, 4294901760
          %529 = vmatpush.msra.mxu0 %v528
          %v530 = vand.u32 %v305, 4294901760
          %531 = vmatpush.msra.mxu0 %v530
          %v532 = vand.u32 %v304, 4294901760
          %533 = vmatpush.msra.mxu0 %v532
          %v534 = vand.u32 %v303, 4294901760
          %535 = vmatpush.msra.mxu0 %v534
          %v536 = vand.u32 %v302, 4294901760
          %537 = vmatpush.msra.mxu0 %v536
          %v538 = vand.u32 %v301, 4294901760
          %539 = vmatpush.msra.mxu0 %v538
          %v540 = vand.u32 %v300, 4294901760
          %541 = vmatpush.msra.mxu0 %v540
          %v542 = vand.u32 %v299, 4294901760
          %543 = vmatpush.msra.mxu0 %v542
          %v544 = vand.u32 %v310, 4294901760
          %545 = vmatmul.f32.gmra.mxu0 %v544
          %v546 = vpop.f32.mrf.mxu0
          %v547 = vadd.f32 %v518, %v546
          %548 = vdwg.mxu0
          %v549 = vmax.f32 %v547, 0.0
          %v550 = vld [vmem:[%s2] sm:$0xff]
          %v551 = vld [vmem:[%s2 + $0x8] sm:$0xff]
          %v552 = vld [vmem:[%s2 + $0x10] sm:$0xff]
          %v553 = vld [vmem:[%s2 + $0x18] sm:$0xff]
          %v554 = vld [vmem:[%s2 + $0x20] sm:$0xff]
          %v555 = vld [vmem:[%s2 + $0x28] sm:$0xff]
          %v556 = vld [vmem:[%s2 + $0x30] sm:$0xff]
          %v557 = vld [vmem:[%s2 + $0x38] sm:$0xff]
          %vm558 = vcmask 31744
          %v560 = vsel %vm558, %v550, 0
          %v563 = vsel %vm558, %v551, 0
          %v566 = vsel %vm558, %v552, 0
          %v569 = vsel %vm558, %v553, 0
          %v572 = vsel %vm558, %v554, 0
          %v575 = vsel %vm558, %v555, 0
          %v578 = vsel %vm558, %v556, 0
          %v581 = vsel %vm558, %v557, 0
          %vm583 = vcmask 1043456
          %v585 = vsel %vm583, %v549, 0
          %587 = vmatpush.msra.mxu0 0.0
          %588 = vmatpush.msra.mxu0 0.0
          %589 = vmatpush.msra.mxu0 0.0
          %590 = vmatpush.msra.mxu0 0.0
          %591 = vmatpush.msra.mxu0 0.0
          %592 = vmatpush.msra.mxu0 0.0
          %593 = vmatpush.msra.mxu0 0.0
          %594 = vmatpush.msra.mxu0 0.0
          %595 = vmatpush.msra.mxu0 0.0
          %596 = vmatpush.msra.mxu0 0.0
          %597 = vmatpush.msra.mxu0 0.0
          %598 = vmatpush.msra.mxu0 0.0
          %599 = vmatpush.msra.mxu0 0.0
          %600 = vmatpush.msra.mxu0 0.0
          %601 = vmatpush.msra.mxu0 0.0
          %v602 = vand.u32 %v585, 4294901760
          %603 = vmatpush.msra.mxu0 %v602
          %v604 = vand.u32 %v560, 4294901760
          %v605 = vsub.f32 %v560, %v604
          %v606 = vand.u32 %v605, 4294901760
          %v607 = vsub.f32 %v605, %v606
          %v608 = vand.u32 %v607, 4294901760
          %609 = vmatmul.f32.gmra.mxu0 %v608
          %v610 = vpop.f32.mrf.mxu0
          %v611 = vadd.f32 0.0, %v610
          %v612 = vand.u32 %v563, 4294901760
          %v613 = vsub.f32 %v563, %v612
          %v614 = vand.u32 %v613, 4294901760
          %v615 = vsub.f32 %v613, %v614
          %v616 = vand.u32 %v615, 4294901760
          %617 = vmatmul.f32.gmra.mxu0 %v616
          %v618 = vpop.f32.mrf.mxu0
          %v619 = vadd.f32 0.0, %v618
          %v620 = vand.u32 %v566, 4294901760
          %v621 = vsub.f32 %v566, %v620
          %v622 = vand.u32 %v621, 4294901760
          %v623 = vsub.f32 %v621, %v622
          %v624 = vand.u32 %v623, 4294901760
          %625 = vmatmul.f32.gmra.mxu0 %v624
          %v626 = vpop.f32.mrf.mxu0
          %v627 = vadd.f32 0.0, %v626
          %v628 = vand.u32 %v569, 4294901760
          %v629 = vsub.f32 %v569, %v628
          %v630 = vand.u32 %v629, 4294901760
          %v631 = vsub.f32 %v629, %v630
          %v632 = vand.u32 %v631, 4294901760
          %633 = vmatmul.f32.gmra.mxu0 %v632
          %v634 = vpop.f32.mrf.mxu0
          %v635 = vadd.f32 0.0, %v634
          %v636 = vand.u32 %v572, 4294901760
          %v637 = vsub.f32 %v572, %v636
          %v638 = vand.u32 %v637, 4294901760
          %v639 = vsub.f32 %v637, %v638
          %v640 = vand.u32 %v639, 4294901760
          %641 = vmatmul.f32.gmra.mxu0 %v640
          %v642 = vpop.f32.mrf.mxu0
          %v643 = vadd.f32 0.0, %v642
          %v644 = vand.u32 %v575, 4294901760
          %v645 = vsub.f32 %v575, %v644
          %v646 = vand.u32 %v645, 4294901760
          %v647 = vsub.f32 %v645, %v646
          %v648 = vand.u32 %v647, 4294901760
          %649 = vmatmul.f32.gmra.mxu0 %v648
          %v650 = vpop.f32.mrf.mxu0
          %v651 = vadd.f32 0.0, %v650
          %v652 = vand.u32 %v578, 4294901760
          %v653 = vsub.f32 %v578, %v652
          %v654 = vand.u32 %v653, 4294901760
          %v655 = vsub.f32 %v653, %v654
          %v656 = vand.u32 %v655, 4294901760
          %657 = vmatmul.f32.gmra.mxu0 %v656
          %v658 = vpop.f32.mrf.mxu0
          %v659 = vadd.f32 0.0, %v658
          %v660 = vand.u32 %v581, 4294901760
          %v661 = vsub.f32 %v581, %v660
          %v662 = vand.u32 %v661, 4294901760
          %v663 = vsub.f32 %v661, %v662
          %v664 = vand.u32 %v663, 4294901760
          %665 = vmatmul.f32.gmra.mxu0 %v664
          %v666 = vpop.f32.mrf.mxu0
          %v667 = vadd.f32 0.0, %v666
          %668 = vdwg.mxu0
          %669 = vmatpush.msra.mxu0 0.0
          %670 = vmatpush.msra.mxu0 0.0
          %671 = vmatpush.msra.mxu0 0.0
          %672 = vmatpush.msra.mxu0 0.0
          %673 = vmatpush.msra.mxu0 0.0
          %674 = vmatpush.msra.mxu0 0.0
          %675 = vmatpush.msra.mxu0 0.0
          %676 = vmatpush.msra.mxu0 0.0
          %677 = vmatpush.msra.mxu0 0.0
          %678 = vmatpush.msra.mxu0 0.0
          %679 = vmatpush.msra.mxu0 0.0
          %680 = vmatpush.msra.mxu0 0.0
          %681 = vmatpush.msra.mxu0 0.0
          %682 = vmatpush.msra.mxu0 0.0
          %683 = vmatpush.msra.mxu0 0.0
          %v684 = vand.u32 %v585, 4294901760
          %v685 = vsub.f32 %v585, %v684
          %v686 = vand.u32 %v685, 4294901760
          %v687 = vsub.f32 %v685, %v686
          %v688 = vand.u32 %v687, 4294901760
          %689 = vmatpush.msra.mxu0 %v688
          %v690 = vand.u32 %v560, 4294901760
          %691 = vmatmul.f32.gmra.mxu0 %v690
          %v692 = vpop.f32.mrf.mxu0
          %v693 = vadd.f32 %v611, %v692
          %v694 = vand.u32 %v563, 4294901760
          %695 = vmatmul.f32.gmra.mxu0 %v694
          %v696 = vpop.f32.mrf.mxu0
          %v697 = vadd.f32 %v619, %v696
          %v698 = vand.u32 %v566, 4294901760
          %699 = vmatmul.f32.gmra.mxu0 %v698
          %v700 = vpop.f32.mrf.mxu0
          %v701 = vadd.f32 %v627, %v700
          %v702 = vand.u32 %v569, 4294901760
          %703 = vmatmul.f32.gmra.mxu0 %v702
          %v704 = vpop.f32.mrf.mxu0
          %v705 = vadd.f32 %v635, %v704
          %v706 = vand.u32 %v572, 4294901760
          %707 = vmatmul.f32.gmra.mxu0 %v706
          %v708 = vpop.f32.mrf.mxu0
          %v709 = vadd.f32 %v643, %v708
          %v710 = vand.u32 %v575, 4294901760
          %711 = vmatmul.f32.gmra.mxu0 %v710
          %v712 = vpop.f32.mrf.mxu0
          %v713 = vadd.f32 %v651, %v712
          %v714 = vand.u32 %v578, 4294901760
          %715 = vmatmul.f32.gmra.mxu0 %v714
          %v716 = vpop.f32.mrf.mxu0
          %v717 = vadd.f32 %v659, %v716
          %v718 = vand.u32 %v581, 4294901760
          %719 = vmatmul.f32.gmra.mxu0 %v718
          %v720 = vpop.f32.mrf.mxu0
          %v721 = vadd.f32 %v667, %v720
          %722 = vdwg.mxu0
          %723 = vmatpush.msra.mxu0 0.0
          %724 = vmatpush.msra.mxu0 0.0
          %725 = vmatpush.msra.mxu0 0.0
          %726 = vmatpush.msra.mxu0 0.0
          %727 = vmatpush.msra.mxu0 0.0
          %728 = vmatpush.msra.mxu0 0.0
          %729 = vmatpush.msra.mxu0 0.0
          %730 = vmatpush.msra.mxu0 0.0
          %731 = vmatpush.msra.mxu0 0.0
          %732 = vmatpush.msra.mxu0 0.0
          %733 = vmatpush.msra.mxu0 0.0
          %734 = vmatpush.msra.mxu0 0.0
          %735 = vmatpush.msra.mxu0 0.0
          %736 = vmatpush.msra.mxu0 0.0
          %737 = vmatpush.msra.mxu0 0.0
          %v738 = vand.u32 %v585, 4294901760
          %v739 = vsub.f32 %v585, %v738
          %740 = vmatpush.msra.mxu0 %v739
          %v741 = vand.u32 %v560, 4294901760
          %v742 = vsub.f32 %v560, %v741
          %743 = vmatmul.f32.gmra.mxu0 %v742
          %v744 = vpop.f32.mrf.mxu0
          %v745 = vadd.f32 %v693, %v744
          %v746 = vand.u32 %v563, 4294901760
          %v747 = vsub.f32 %v563, %v746
          %748 = vmatmul.f32.gmra.mxu0 %v747
          %v749 = vpop.f32.mrf.mxu0
          %v750 = vadd.f32 %v697, %v749
          %v751 = vand.u32 %v566, 4294901760
          %v752 = vsub.f32 %v566, %v751
          %753 = vmatmul.f32.gmra.mxu0 %v752
          %v754 = vpop.f32.mrf.mxu0
          %v755 = vadd.f32 %v701, %v754
          %v756 = vand.u32 %v569, 4294901760
          %v757 = vsub.f32 %v569, %v756
          %758 = vmatmul.f32.gmra.mxu0 %v757
          %v759 = vpop.f32.mrf.mxu0
          %v760 = vadd.f32 %v705, %v759
          %v761 = vand.u32 %v572, 4294901760
          %v762 = vsub.f32 %v572, %v761
          %763 = vmatmul.f32.gmra.mxu0 %v762
          %v764 = vpop.f32.mrf.mxu0
          %v765 = vadd.f32 %v709, %v764
          %v766 = vand.u32 %v575, 4294901760
          %v767 = vsub.f32 %v575, %v766
          %768 = vmatmul.f32.gmra.mxu0 %v767
          %v769 = vpop.f32.mrf.mxu0
          %v770 = vadd.f32 %v713, %v769
          %v771 = vand.u32 %v578, 4294901760
          %v772 = vsub.f32 %v578, %v771
          %773 = vmatmul.f32.gmra.mxu0 %v772
          %v774 = vpop.f32.mrf.mxu0
          %v775 = vadd.f32 %v717, %v774
          %v776 = vand.u32 %v581, 4294901760
          %v777 = vsub.f32 %v581, %v776
          %778 = vmatmul.f32.gmra.mxu0 %v777
          %v779 = vpop.f32.mrf.mxu0
          %v780 = vadd.f32 %v721, %v779
          %781 = vdwg.mxu0
          %782 = vmatpush.msra.mxu0 0.0
          %783 = vmatpush.msra.mxu0 0.0
          %784 = vmatpush.msra.mxu0 0.0
          %785 = vmatpush.msra.mxu0 0.0
          %786 = vmatpush.msra.mxu0 0.0
          %787 = vmatpush.msra.mxu0 0.0
          %788 = vmatpush.msra.mxu0 0.0
          %789 = vmatpush.msra.mxu0 0.0
          %790 = vmatpush.msra.mxu0 0.0
          %791 = vmatpush.msra.mxu0 0.0
          %792 = vmatpush.msra.mxu0 0.0
          %793 = vmatpush.msra.mxu0 0.0
          %794 = vmatpush.msra.mxu0 0.0
          %795 = vmatpush.msra.mxu0 0.0
          %796 = vmatpush.msra.mxu0 0.0
          %v797 = vand.u32 %v585, 4294901760
          %798 = vmatpush.msra.mxu0 %v797
          %v799 = vand.u32 %v560, 4294901760
          %v800 = vsub.f32 %v560, %v799
          %v801 = vand.u32 %v800, 4294901760
          %802 = vmatmul.f32.gmra.mxu0 %v801
          %v803 = vpop.f32.mrf.mxu0
          %v804 = vadd.f32 %v745, %v803
          %v805 = vand.u32 %v563, 4294901760
          %v806 = vsub.f32 %v563, %v805
          %v807 = vand.u32 %v806, 4294901760
          %808 = vmatmul.f32.gmra.mxu0 %v807
          %v809 = vpop.f32.mrf.mxu0
          %v810 = vadd.f32 %v750, %v809
          %v811 = vand.u32 %v566, 4294901760
          %v812 = vsub.f32 %v566, %v811
          %v813 = vand.u32 %v812, 4294901760
          %814 = vmatmul.f32.gmra.mxu0 %v813
          %v815 = vpop.f32.mrf.mxu0
          %v816 = vadd.f32 %v755, %v815
          %v817 = vand.u32 %v569, 4294901760
          %v818 = vsub.f32 %v569, %v817
          %v819 = vand.u32 %v818, 4294901760
          %820 = vmatmul.f32.gmra.mxu0 %v819
          %v821 = vpop.f32.mrf.mxu0
          %v822 = vadd.f32 %v760, %v821
          %v823 = vand.u32 %v572, 4294901760
          %v824 = vsub.f32 %v572, %v823
          %v825 = vand.u32 %v824, 4294901760
          %826 = vmatmul.f32.gmra.mxu0 %v825
          %v827 = vpop.f32.mrf.mxu0
          %v828 = vadd.f32 %v765, %v827
          %v829 = vand.u32 %v575, 4294901760
          %v830 = vsub.f32 %v575, %v829
          %v831 = vand.u32 %v830, 4294901760
          %832 = vmatmul.f32.gmra.mxu0 %v831
          %v833 = vpop.f32.mrf.mxu0
          %v834 = vadd.f32 %v770, %v833
          %v835 = vand.u32 %v578, 4294901760
          %v836 = vsub.f32 %v578, %v835
          %v837 = vand.u32 %v836, 4294901760
          %838 = vmatmul.f32.gmra.mxu0 %v837
          %v839 = vpop.f32.mrf.mxu0
          %v840 = vadd.f32 %v775, %v839
          %v841 = vand.u32 %v581, 4294901760
          %v842 = vsub.f32 %v581, %v841
          %v843 = vand.u32 %v842, 4294901760
          %844 = vmatmul.f32.gmra.mxu0 %v843
          %v845 = vpop.f32.mrf.mxu0
          %v846 = vadd.f32 %v780, %v845
          %847 = vdwg.mxu0
          %848 = vmatpush.msra.mxu0 0.0
          %849 = vmatpush.msra.mxu0 0.0
          %850 = vmatpush.msra.mxu0 0.0
          %851 = vmatpush.msra.mxu0 0.0
          %852 = vmatpush.msra.mxu0 0.0
          %853 = vmatpush.msra.mxu0 0.0
          %854 = vmatpush.msra.mxu0 0.0
          %855 = vmatpush.msra.mxu0 0.0
          %856 = vmatpush.msra.mxu0 0.0
          %857 = vmatpush.msra.mxu0 0.0
          %858 = vmatpush.msra.mxu0 0.0
          %859 = vmatpush.msra.mxu0 0.0
          %860 = vmatpush.msra.mxu0 0.0
          %861 = vmatpush.msra.mxu0 0.0
          %862 = vmatpush.msra.mxu0 0.0
          %v863 = vand.u32 %v585, 4294901760
          %v864 = vsub.f32 %v585, %v863
          %v865 = vand.u32 %v864, 4294901760
          %866 = vmatpush.msra.mxu0 %v865
          %v867 = vand.u32 %v560, 4294901760
          %868 = vmatmul.f32.gmra.mxu0 %v867
          %v869 = vpop.f32.mrf.mxu0
          %v870 = vadd.f32 %v804, %v869
          %v871 = vand.u32 %v563, 4294901760
          %872 = vmatmul.f32.gmra.mxu0 %v871
          %v873 = vpop.f32.mrf.mxu0
          %v874 = vadd.f32 %v810, %v873
          %v875 = vand.u32 %v566, 4294901760
          %876 = vmatmul.f32.gmra.mxu0 %v875
          %v877 = vpop.f32.mrf.mxu0
          %v878 = vadd.f32 %v816, %v877
          %v879 = vand.u32 %v569, 4294901760
          %880 = vmatmul.f32.gmra.mxu0 %v879
          %v881 = vpop.f32.mrf.mxu0
          %v882 = vadd.f32 %v822, %v881
          %v883 = vand.u32 %v572, 4294901760
          %884 = vmatmul.f32.gmra.mxu0 %v883
          %v885 = vpop.f32.mrf.mxu0
          %v886 = vadd.f32 %v828, %v885
          %v887 = vand.u32 %v575, 4294901760
          %888 = vmatmul.f32.gmra.mxu0 %v887
          %v889 = vpop.f32.mrf.mxu0
          %v890 = vadd.f32 %v834, %v889
          %v891 = vand.u32 %v578, 4294901760
          %892 = vmatmul.f32.gmra.mxu0 %v891
          %v893 = vpop.f32.mrf.mxu0
          %v894 = vadd.f32 %v840, %v893
          %v895 = vand.u32 %v581, 4294901760
          %896 = vmatmul.f32.gmra.mxu0 %v895
          %v897 = vpop.f32.mrf.mxu0
          %v898 = vadd.f32 %v846, %v897
          %899 = vdwg.mxu0
          %900 = vmatpush.msra.mxu0 0.0
          %901 = vmatpush.msra.mxu0 0.0
          %902 = vmatpush.msra.mxu0 0.0
          %903 = vmatpush.msra.mxu0 0.0
          %904 = vmatpush.msra.mxu0 0.0
          %905 = vmatpush.msra.mxu0 0.0
          %906 = vmatpush.msra.mxu0 0.0
          %907 = vmatpush.msra.mxu0 0.0
          %908 = vmatpush.msra.mxu0 0.0
          %909 = vmatpush.msra.mxu0 0.0
          %910 = vmatpush.msra.mxu0 0.0
          %911 = vmatpush.msra.mxu0 0.0
          %912 = vmatpush.msra.mxu0 0.0
          %913 = vmatpush.msra.mxu0 0.0
          %914 = vmatpush.msra.mxu0 0.0
          %v915 = vand.u32 %v585, 4294901760
          %916 = vmatpush.msra.mxu0 %v915
          %v917 = vand.u32 %v560, 4294901760
          %918 = vmatmul.f32.gmra.mxu0 %v917
          %v919 = vpop.f32.mrf.mxu0
          %v920 = vadd.f32 %v870, %v919
          %v921 = vand.u32 %v563, 4294901760
          %922 = vmatmul.f32.gmra.mxu0 %v921
          %v923 = vpop.f32.mrf.mxu0
          %v924 = vadd.f32 %v874, %v923
          %v925 = vand.u32 %v566, 4294901760
          %926 = vmatmul.f32.gmra.mxu0 %v925
          %v927 = vpop.f32.mrf.mxu0
          %v928 = vadd.f32 %v878, %v927
          %v929 = vand.u32 %v569, 4294901760
          %930 = vmatmul.f32.gmra.mxu0 %v929
          %v931 = vpop.f32.mrf.mxu0
          %v932 = vadd.f32 %v882, %v931
          %v933 = vand.u32 %v572, 4294901760
          %934 = vmatmul.f32.gmra.mxu0 %v933
          %v935 = vpop.f32.mrf.mxu0
          %v936 = vadd.f32 %v886, %v935
          %v937 = vand.u32 %v575, 4294901760
          %938 = vmatmul.f32.gmra.mxu0 %v937
          %v939 = vpop.f32.mrf.mxu0
          %v940 = vadd.f32 %v890, %v939
          %v941 = vand.u32 %v578, 4294901760
          %942 = vmatmul.f32.gmra.mxu0 %v941
          %v943 = vpop.f32.mrf.mxu0
          %v944 = vadd.f32 %v894, %v943
          %v945 = vand.u32 %v581, 4294901760
          %946 = vmatmul.f32.gmra.mxu0 %v945
          %v947 = vpop.f32.mrf.mxu0
          %v948 = vadd.f32 %v898, %v947
          %949 = vdwg.mxu0
          %v950 = vxor.u32 %v920, 2147483648
          %v951 = vxor.u32 %v924, 2147483648
          %v952 = vxor.u32 %v928, 2147483648
          %v953 = vxor.u32 %v932, 2147483648
          %v954 = vxor.u32 %v936, 2147483648
          %v955 = vxor.u32 %v940, 2147483648
          %v956 = vxor.u32 %v944, 2147483648
          %v957 = vxor.u32 %v948, 2147483648
          %v958 = vmul.f32 %v950, 1.442695
          %v959 = vpow.pop %v958
          %v960 = vmul.f32 %v951, 1.442695
          %v961 = vpow.pop %v960
          %v962 = vmul.f32 %v952, 1.442695
          %v963 = vpow.pop %v962
          %v964 = vmul.f32 %v953, 1.442695
          %v965 = vpow.pop %v964
          %v966 = vmul.f32 %v954, 1.442695
          %v967 = vpow.pop %v966
          %v968 = vmul.f32 %v955, 1.442695
          %v969 = vpow.pop %v968
          %v970 = vmul.f32 %v956, 1.442695
          %v971 = vpow.pop %v970
          %v972 = vmul.f32 %v957, 1.442695
          %v973 = vpow.pop %v972
          %v974 = vadd.f32 %v959, 1.0
          %v975 = vadd.f32 %v961, 1.0
          %v976 = vadd.f32 %v963, 1.0
          %v977 = vadd.f32 %v965, 1.0
          %v978 = vadd.f32 %v967, 1.0
          %v979 = vadd.f32 %v969, 1.0
          %v980 = vadd.f32 %v971, 1.0
          %v981 = vadd.f32 %v973, 1.0
          %v982 = vrcp.pop %v974
          %v983 = vmul.f32 %v974, %v982
          %v984 = vsub.f32 1.0, %v983
          %v985 = vmul.f32 %v982, %v984
          %v986 = vadd.f32 %v982, %v985
          %vm987 = vweird.f32 %v974
          %vm988 = vweird.f32 %v982
          %vm989 = vmor %vm987, %vm988
          %v990 = vsel %vm989, %v982, %v986
          %v991 = vand.u32 2147483647, %v974
          %vm992 = vcmp.eq.f32.partialorder %v991, 8.507059e+37
          %v993 = vand.u32 %v974, 2147483648
          %v994 = vor.u32 1.1754944e-38, %v993
          %v995 = vsel %vm992, %v994, %v990
          %v996 = vmul.f32 1.0, %v995
          %v997 = vrcp.pop %v975
          %v998 = vmul.f32 %v975, %v997
          %v999 = vsub.f32 1.0, %v998
          %v1000 = vmul.f32 %v997, %v999
          %v1001 = vadd.f32 %v997, %v1000
          %vm1002 = vweird.f32 %v975
          %vm1003 = vweird.f32 %v997
          %vm1004 = vmor %vm1002, %vm1003
          %v1005 = vsel %vm1004, %v997, %v1001
          %v1006 = vand.u32 2147483647, %v975
          %vm1007 = vcmp.eq.f32.partialorder %v1006, 8.507059e+37
          %v1008 = vand.u32 %v975, 2147483648
          %v1009 = vor.u32 1.1754944e-38, %v1008
          %v1010 = vsel %vm1007, %v1009, %v1005
          %v1011 = vmul.f32 1.0, %v1010
          %v1012 = vrcp.pop %v976
          %v1013 = vmul.f32 %v976, %v1012
          %v1014 = vsub.f32 1.0, %v1013
          %v1015 = vmul.f32 %v1012, %v1014
          %v1016 = vadd.f32 %v1012, %v1015
          %vm1017 = vweird.f32 %v976
          %vm1018 = vweird.f32 %v1012
          %vm1019 = vmor %vm1017, %vm1018
          %v1020 = vsel %vm1019, %v1012, %v1016
          %v1021 = vand.u32 2147483647, %v976
          %vm1022 = vcmp.eq.f32.partialorder %v1021, 8.507059e+37
          %v1023 = vand.u32 %v976, 2147483648
          %v1024 = vor.u32 1.1754944e-38, %v1023
          %v1025 = vsel %vm1022, %v1024, %v1020
          %v1026 = vmul.f32 1.0, %v1025
          %v1027 = vrcp.pop %v977
          %v1028 = vmul.f32 %v977, %v1027
          %v1029 = vsub.f32 1.0, %v1028
          %v1030 = vmul.f32 %v1027, %v1029
          %v1031 = vadd.f32 %v1027, %v1030
          %vm1032 = vweird.f32 %v977
          %vm1033 = vweird.f32 %v1027
          %vm1034 = vmor %vm1032, %vm1033
          %v1035 = vsel %vm1034, %v1027, %v1031
          %v1036 = vand.u32 2147483647, %v977
          %vm1037 = vcmp.eq.f32.partialorder %v1036, 8.507059e+37
          %v1038 = vand.u32 %v977, 2147483648
          %v1039 = vor.u32 1.1754944e-38, %v1038
          %v1040 = vsel %vm1037, %v1039, %v1035
          %v1041 = vmul.f32 1.0, %v1040
          %v1042 = vrcp.pop %v978
          %v1043 = vmul.f32 %v978, %v1042
          %v1044 = vsub.f32 1.0, %v1043
          %v1045 = vmul.f32 %v1042, %v1044
          %v1046 = vadd.f32 %v1042, %v1045
          %vm1047 = vweird.f32 %v978
          %vm1048 = vweird.f32 %v1042
          %vm1049 = vmor %vm1047, %vm1048
          %v1050 = vsel %vm1049, %v1042, %v1046
          %v1051 = vand.u32 2147483647, %v978
          %vm1052 = vcmp.eq.f32.partialorder %v1051, 8.507059e+37
          %v1053 = vand.u32 %v978, 2147483648
          %v1054 = vor.u32 1.1754944e-38, %v1053
          %v1055 = vsel %vm1052, %v1054, %v1050
          %v1056 = vmul.f32 1.0, %v1055
          %v1057 = vrcp.pop %v979
          %v1058 = vmul.f32 %v979, %v1057
          %v1059 = vsub.f32 1.0, %v1058
          %v1060 = vmul.f32 %v1057, %v1059
          %v1061 = vadd.f32 %v1057, %v1060
          %vm1062 = vweird.f32 %v979
          %vm1063 = vweird.f32 %v1057
          %vm1064 = vmor %vm1062, %vm1063
          %v1065 = vsel %vm1064, %v1057, %v1061
          %v1066 = vand.u32 2147483647, %v979
          %vm1067 = vcmp.eq.f32.partialorder %v1066, 8.507059e+37
          %v1068 = vand.u32 %v979, 2147483648
          %v1069 = vor.u32 1.1754944e-38, %v1068
          %v1070 = vsel %vm1067, %v1069, %v1065
          %v1071 = vmul.f32 1.0, %v1070
          %v1072 = vrcp.pop %v980
          %v1073 = vmul.f32 %v980, %v1072
          %v1074 = vsub.f32 1.0, %v1073
          %v1075 = vmul.f32 %v1072, %v1074
          %v1076 = vadd.f32 %v1072, %v1075
          %vm1077 = vweird.f32 %v980
          %vm1078 = vweird.f32 %v1072
          %vm1079 = vmor %vm1077, %vm1078
          %v1080 = vsel %vm1079, %v1072, %v1076
          %v1081 = vand.u32 2147483647, %v980
          %vm1082 = vcmp.eq.f32.partialorder %v1081, 8.507059e+37
          %v1083 = vand.u32 %v980, 2147483648
          %v1084 = vor.u32 1.1754944e-38, %v1083
          %v1085 = vsel %vm1082, %v1084, %v1080
          %v1086 = vmul.f32 1.0, %v1085
          %v1087 = vrcp.pop %v981
          %v1088 = vmul.f32 %v981, %v1087
          %v1089 = vsub.f32 1.0, %v1088
          %v1090 = vmul.f32 %v1087, %v1089
          %v1091 = vadd.f32 %v1087, %v1090
          %vm1092 = vweird.f32 %v981
          %vm1093 = vweird.f32 %v1087
          %vm1094 = vmor %vm1092, %vm1093
          %v1095 = vsel %vm1094, %v1087, %v1091
          %v1096 = vand.u32 2147483647, %v981
          %vm1097 = vcmp.eq.f32.partialorder %v1096, 8.507059e+37
          %v1098 = vand.u32 %v981, 2147483648
          %v1099 = vor.u32 1.1754944e-38, %v1098
          %v1100 = vsel %vm1097, %v1099, %v1095
          %v1101 = vmul.f32 1.0, %v1100
          %1102 = vst.msk [vmem:[%s209] sm:$0xff] %vm279, %v996
          %1103 = vst.msk [vmem:[%s209 + $0x8] sm:$0xff] %vm279, %v1011
          %1104 = vst.msk [vmem:[%s209 + $0x10] sm:$0xff] %vm279, %v1026
          %1105 = vst.msk [vmem:[%s209 + $0x18] sm:$0xff] %vm279, %v1041
          %1106 = vst.msk [vmem:[%s209 + $0x20] sm:$0xff] %vm279, %v1056
          %1107 = vst.msk [vmem:[%s209 + $0x28] sm:$0xff] %vm279, %v1071
          %1108 = vst.msk [vmem:[%s209 + $0x30] sm:$0xff] %vm279, %v1086
          %1109 = vst.msk [vmem:[%s209 + $0x38] sm:$0xff] %vm279, %v1101
        $region44: #{tpu_custom_call.1} parent=31 // pred_fallthru
          _
        %p1110 = scmp.lt.s32.totalorder %s21, 1
        %s1111 = scalar_select %p1110, %s21, 1
        %s1112 = smul.addr %s1111, 8
        %s1113 = smul.addr %s1112, 8
        %s1114 = scalar_lea.vmem %s3, %s1113
        // Predicated region
        $region45: #{tpu_custom_call.1} parent=31 // pred_check
          %p1115 = pneg %p117
        $region46: #{tpu_custom_call.1} parent=31 // pred_check_branch
          %1117 = sbr.rel (%p1115) target = $region48
        $region47: #{tpu_custom_call.1} parent=31 // pred_region
          _
        $region48: #{tpu_custom_call.1} parent=31 // pred_fallthru
          _
      $region32: #{tpu_custom_call.1} parent=5 // pred_fallthru
        _
      %p1118 = scmp.le.s32.totalorder 2, %s12
      // Predicated region
      $region49: #{tpu_custom_call.1} parent=5 // pred_check
        %p1119 = pneg %p1118
      $region50: #{tpu_custom_call.1} parent=5 // pred_check_branch
        %1121 = sbr.rel (%p1119) target = $region52
      $region51: #{tpu_custom_call.1} parent=5 // pred_region
        %s1122 = ssub.s32 %s12, 2
        // Predicated region
        $region53: #{tpu_custom_call.1} parent=51 // pred_check
          %p1123 = pneg %p123
        $region54: #{tpu_custom_call.1} parent=51 // pred_check_branch
          %1125 = sbr.rel (%p1123) target = $region56
        $region55: #{tpu_custom_call.1} parent=51 // pred_region
          %p1126 = scmp.lt.s32.totalorder %s23, 1
          %s1127 = scalar_select %p1126, %s23, 1
          %s1128 = smul.addr %s1127, 8
          %s1129 = smul.addr %s1128, 8
          %s1130 = scalar_lea.vmem %s3, %s1129
        $region56: #{tpu_custom_call.1} parent=51 // pred_fallthru
          _
      $region52: #{tpu_custom_call.1} parent=5 // pred_fallthru
        _
    $region6: #{tpu_custom_call.1} parent=1 // loop_footer
      %s16 = sadd.s32 1, %s12
    $region7: #{tpu_custom_call.1} parent=1 // loop_footer_branch
      %11 = sbr.rel target = $region3
    $region8: #{tpu_custom_call.1} parent=1 // loop_exit
      _
    %1131 = vsyncpa [#allocation4], 1
    %s1132 = scalar_lea.sflag [#allocation4], 1
    %1133 = vsyncpa %s1132, 1

</llo_original>
